<compile_context>
chip_gen: v7x
topology: tpu7x:2x2x1
jax: 0.10.0
libtpu: 0.0.40
codegen_flags: <defaults>
</compile_context>

<pallas_src>
import functools

import jax
import jax.numpy as jnp
from jax.experimental import pallas as pl
from jax.experimental.pallas import tpu as pltpu

# Large finite negative for masked scores (avoids NaN if a row were fully masked).
NEG_INF = -1e30


def _vmem_limit_bytes():
    """Generation-aware scoped-VMEM budget: ~75% of physical VMEM, <= 100 MiB.

    v5e/v6e (128 MiB physical) -> ~96-100 MiB; v7x (64 MiB physical) -> 48 MiB.
    Falls back to 96 MiB if the hardware query is unavailable.
    """
    cap = 128 * 1024 * 1024
    try:
        info = pltpu.get_tpu_info()
        cap = int(getattr(info, "vmem_capacity_bytes", cap)) or cap
    except Exception:
        pass
    return max(32 * 1024 * 1024, min(int(cap * 0.75), 100 * 1024 * 1024))


VMEM_LIMIT_BYTES = _vmem_limit_bytes()


def _pick_tile(dim, candidates):
    """Largest candidate that evenly divides `dim`; fall back to the full dim."""
    for c in candidates:
        if c <= dim and dim % c == 0:
            return c
    return dim


# ----------------------------------------------------------------------------
# Tiled linear kernels: (M, K) @ (K, N) [+ bias] with f32 accumulation
# ----------------------------------------------------------------------------
def _linear_kernel(x_ref, w_ref, o_ref, acc_ref, *, mxu_dtype):
    @pl.when(pl.program_id(2) == 0)
    def _init():
        acc_ref[...] = jnp.zeros_like(acc_ref)

    acc_ref[...] += jnp.dot(
        x_ref[...].astype(mxu_dtype),
        w_ref[...].astype(mxu_dtype),
        preferred_element_type=jnp.float32,
    )

    @pl.when(pl.program_id(2) == pl.num_programs(2) - 1)
    def _store():
        o_ref[...] = acc_ref[...].astype(o_ref.dtype)


def _linear_bias_kernel(x_ref, w_ref, b_ref, o_ref, acc_ref, *, mxu_dtype):
    @pl.when(pl.program_id(2) == 0)
    def _init():
        acc_ref[...] = jnp.zeros_like(acc_ref)

    acc_ref[...] += jnp.dot(
        x_ref[...].astype(mxu_dtype),
        w_ref[...].astype(mxu_dtype),
        preferred_element_type=jnp.float32,
    )

    @pl.when(pl.program_id(2) == pl.num_programs(2) - 1)
    def _store():
        o_ref[...] = (acc_ref[...] + b_ref[...].astype(jnp.float32)).astype(o_ref.dtype)


def linear(x, w, bias=None, *, mxu_dtype=None,
           tm_target=512, tn_target=1024, tk_target=512):
    """y = x @ w (+ bias). x: (M, K), w: (K, N), bias: (1, N) or None."""
    M, K = x.shape
    Kw, N = w.shape
    assert K == Kw
    if mxu_dtype is None:
        mxu_dtype = x.dtype
    tm = _pick_tile(M, (tm_target, 256, 128, 64, 32, 16, 8))
    tn = _pick_tile(N, (tn_target, 512, 256, 128))   # lane dim: 128-multiple or full
    tk = _pick_tile(K, (tk_target, 256, 128))        # 128-multiple or full
    grid = (M // tm, N // tn, K // tk)

    in_specs = [
        pl.BlockSpec((tm, tk), lambda i, j, k: (i, k)),
        pl.BlockSpec((tk, tn), lambda i, j, k: (k, j)),
    ]
    args = (x, w)
    kernel = functools.partial(_linear_kernel, mxu_dtype=mxu_dtype)
    if bias is not None:
        in_specs.append(pl.BlockSpec((1, tn), lambda i, j, k: (0, j)))
        args = (x, w, bias)
        kernel = functools.partial(_linear_bias_kernel, mxu_dtype=mxu_dtype)

    return pl.pallas_call(
        kernel,
        out_shape=jax.ShapeDtypeStruct((M, N), x.dtype),
        grid=grid,
        in_specs=in_specs,
        out_specs=pl.BlockSpec((tm, tn), lambda i, j, k: (i, j)),
        scratch_shapes=[pltpu.VMEM((tm, tn), jnp.float32)],
        compiler_params=pltpu.CompilerParams(
            dimension_semantics=("parallel", "parallel", "arbitrary"),
            vmem_limit_bytes=VMEM_LIMIT_BYTES,
        ),
    )(*args)


# ----------------------------------------------------------------------------
# Flash-style causal attention over all heads of one batch at a time.
#   qkv: (B, T, 3, H, D)  ->  out: (B, T, H*D)   (heads merged, lane-dense)
# ----------------------------------------------------------------------------
def _flash_attn_kernel(q_ref, k_ref, v_ref, o_ref,
                       q_sc, m_ref, l_ref, acc_ref,
                       *, scale, tq, tk, H, D, mxu_dtype):
    qi = pl.program_id(1)
    ki = pl.program_id(2)

    @pl.when(ki == 0)
    def _init():
        m_ref[...] = jnp.full_like(m_ref, NEG_INF)
        l_ref[...] = jnp.zeros_like(l_ref)
        acc_ref[...] = jnp.zeros_like(acc_ref)
        # Hoisted out of the kv loop: (tq, H, D) -> (H, tq, D) head transpose
        # and 1/sqrt(D) scaling, done once per (b, qi) tile.
        q = jnp.transpose(q_ref[...], (1, 0, 2)).astype(jnp.float32) * scale
        q_sc[...] = q.astype(q_sc.dtype)

    # Skip kv blocks entirely above the causal diagonal (requires tq == tk).
    # The K/V index_maps are clamped, so these blocks are never DMA'd either.
    @pl.when(ki <= qi)
    def _compute():
        k = jnp.transpose(k_ref[...], (1, 0, 2)).astype(mxu_dtype)
        v = jnp.transpose(v_ref[...], (1, 0, 2)).astype(mxu_dtype)

        # (H, tq, tk) scores, f32 accumulation on the MXU.
        s = jnp.einsum("hqd,hkd->hqk", q_sc[...], k,
                       preferred_element_type=jnp.float32)

        def online_update(scores):
            m_prev = m_ref[...]                                      # (H, tq, 1)
            m_new = jnp.maximum(m_prev, jnp.max(scores, axis=-1, keepdims=True))
            alpha = jnp.exp(m_prev - m_new)
            p = jnp.exp(scores - m_new)                              # (H, tq, tk)
            l_ref[...] = alpha * l_ref[...] + jnp.sum(p, axis=-1, keepdims=True)
            pv = jnp.einsum("hqk,hkd->hqd", p.astype(mxu_dtype), v,
                            preferred_element_type=jnp.float32)      # (H, tq, D)
            acc_ref[...] = alpha * acc_ref[...] + pv
            m_ref[...] = m_new

        # Two-path masking: only the diagonal block builds/applies the causal
        # mask; interior (fully-below-diagonal) blocks skip it entirely.
        # NOTE: correctness of additive -1e30 masking relies on tq == tk so
        # that ki == qi always contains the diagonal for every query row.
        @pl.when(ki == qi)
        def _diag():
            q_start = qi * tq
            kv_start = ki * tk
            row = q_start + jax.lax.broadcasted_iota(jnp.int32, (tq, tk), 0)
            col = kv_start + jax.lax.broadcasted_iota(jnp.int32, (tq, tk), 1)
            online_update(jnp.where((col <= row)[None, :, :], s, NEG_INF))

        @pl.when(ki < qi)
        def _interior():
            online_update(s)

    @pl.when(ki == pl.num_programs(2) - 1)
    def _finalize():
        # Exact division: runs once per (b, qi) tile, so approx buys nothing.
        out = acc_ref[...] / l_ref[...]                 # (H, tq, D)
        # merge heads -> lane-dense (tq, H*D) output block
        out = jnp.transpose(out, (1, 0, 2)).reshape(tq, H * D)
        o_ref[...] = out.astype(o_ref.dtype)


def causal_attention(qkv, *, tile=None, mxu_dtype=None):
    """qkv: (B, T, 3, H, D) -> (B, T, H*D), causal softmax attention."""
    B, T, three, H, D = qkv.shape
    assert three == 3
    C = H * D
    if mxu_dtype is None:
        mxu_dtype = qkv.dtype
    # 256 suits v6e/v7x MXU; clamps to T at small shapes. Use tile=128 on v5e
    # or for very large H*D on v7x (64 MiB VMEM).
    tq = tile if tile is not None else _pick_tile(T, (256, 128, 64, 32, 16, 8))
    tk = tq  # equal tiles keep the causal block-skip / diag-mask logic valid
    assert T % tq == 0 and T % tk == 0
    scale = 1.0 / float(D) ** 0.5

    kernel = functools.partial(_flash_attn_kernel, scale=scale, tq=tq, tk=tk,
                               H=H, D=D, mxu_dtype=mxu_dtype)

    # Clamp the K/V block index with jnp.minimum(ki, qi): causally-skipped
    # blocks repeat the previous block index -> no DMA for them.
    k_index = lambda b, qi, ki: (b, jnp.minimum(ki, qi), 1, 0, 0)
    v_index = lambda b, qi, ki: (b, jnp.minimum(ki, qi), 2, 0, 0)

    return pl.pallas_call(
        kernel,
        out_shape=jax.ShapeDtypeStruct((B, T, C), qkv.dtype),
        grid=(B, T // tq, T // tk),
        in_specs=[
            pl.BlockSpec((None, tq, None, H, D), lambda b, qi, ki: (b, qi, 0, 0, 0)),
            pl.BlockSpec((None, tk, None, H, D), k_index),
            pl.BlockSpec((None, tk, None, H, D), v_index),
        ],
        out_specs=pl.BlockSpec((None, tq, C), lambda b, qi, ki: (b, qi, 0)),
        scratch_shapes=[
            pltpu.VMEM((H, tq, D), mxu_dtype),    # hoisted, scaled q
            pltpu.VMEM((H, tq, 1), jnp.float32),  # running max m
            pltpu.VMEM((H, tq, 1), jnp.float32),  # running sum l
            pltpu.VMEM((H, tq, D), jnp.float32),  # output accumulator
        ],
        compiler_params=pltpu.CompilerParams(
            dimension_semantics=("parallel", "parallel", "arbitrary"),
            vmem_limit_bytes=VMEM_LIMIT_BYTES,
        ),
    )(qkv, qkv, qkv)


# ----------------------------------------------------------------------------
# Full module forward
# ----------------------------------------------------------------------------
def parallel_mha_forward(x, params, n_head, *, attn_tile=None, mxu_dtype=None):
    """x: (B, T, C). Returns (B, T, C)."""
    B, T, C = x.shape
    assert C % n_head == 0
    D = C // n_head

    # c_attn: PyTorch Linear computes x @ W^T (W is (3C, C), bias=False);
    # we store W^T so the kernel does a plain (M,K)@(K,N).
    qkv = linear(x.reshape(B * T, C), params["w_qkv_t"], mxu_dtype=mxu_dtype)
    qkv = qkv.reshape(B, T, 3, n_head, D)       # free reshape, no HBM copy

    att = causal_attention(qkv, tile=attn_tile, mxu_dtype=mxu_dtype)  # (B,T,C)

    # proj: Linear with bias.
    y = linear(att.reshape(B * T, C), params["w_proj_t"], params["b_proj"],
               mxu_dtype=mxu_dtype)
    return y.reshape(B, T, C)


# ----------------------------------------------------------------------------
# Pure-JAX reference (self-check)
# ----------------------------------------------------------------------------
def reference_forward(x, params, n_head):
    B, T, C = x.shape
    D = C // n_head
    qkv = x @ params["w_qkv_t"]
    q, k, v = jnp.split(qkv, 3, axis=2)
    q = q.reshape(B, T, n_head, D).transpose(0, 2, 1, 3)
    k = k.reshape(B, T, n_head, D).transpose(0, 2, 1, 3)
    v = v.reshape(B, T, n_head, D).transpose(0, 2, 1, 3)
    att = jnp.einsum("bhqd,bhkd->bhqk", q, k) / jnp.sqrt(jnp.float32(D))
    mask = jnp.tril(jnp.ones((T, T), bool))
    att = jnp.where(mask[None, None], att, -jnp.inf)
    att = jax.nn.softmax(att, axis=-1)
    out = jnp.einsum("bhqk,bhkd->bhqd", att, v)
    out = out.transpose(0, 2, 1, 3).reshape(B, T, C)
    return out @ params["w_proj_t"] + params["b_proj"]


if __name__ == "__main__":
    n_embd, n_head = 32, 4

    def make_params(key):
        kw1, kw2, kb = jax.random.split(key, 3)
        return {
            # store transposed weights so kernels compute x @ W^T as PyTorch does
            "w_qkv_t": jax.random.normal(kw1, (n_embd, 3 * n_embd), jnp.float32) * 0.02,
            "w_proj_t": jax.random.normal(kw2, (n_embd, n_embd), jnp.float32) * 0.02,
            "b_proj": jax.random.normal(kb, (1, n_embd), jnp.float32) * 0.02,
        }

    def run_case(B, T, key, attn_tile=None, mxu_dtype=None, atol=1e-4, rtol=1e-3):
        kx, kp = jax.random.split(key)
        x = jax.random.normal(kx, (B, T, n_embd), dtype=jnp.float32)
        params = make_params(kp)
        y = parallel_mha_forward(x, params, n_head,
                                 attn_tile=attn_tile, mxu_dtype=mxu_dtype)
        y = jax.block_until_ready(y)
        y_ref = reference_forward(x, params, n_head)
        assert y.shape == (B, T, n_embd)
        err = jnp.max(jnp.abs(y - y_ref))
        assert jnp.allclose(y, y_ref, atol=atol, rtol=rtol), f"mismatch, max |err|={err}"

    key = jax.random.PRNGKey(0)
    k1, k2, k3 = jax.random.split(key, 3)
    # block_size = 8 (single attention tile), f32 MXU — tight tolerance
    run_case(2, 8, k1)
    # longer sequence with small tiles: exercises the online-softmax kv loop,
    # causal kv-block DMA skipping and the two-path masking
    run_case(2, 32, k2, attn_tile=8)
    # bf16 MXU path (the big throughput lever on v6e/v7x) — looser tolerance
    run_case(2, 32, k3, attn_tile=8, mxu_dtype=jnp.bfloat16, atol=1e-2, rtol=1e-1)

    print("KERNEL_OK")
</pallas_src>

<mosaic_0001>
module attributes {stable_mosaic.version = 11 : i64} {
  func.func @_linear_kernel(%arg0: i32, %arg1: i32, %arg2: i32, %arg3: memref<16x32xf32, #tpu.memory_space<vmem>>, %arg4: memref<32x96xf32, #tpu.memory_space<vmem>>, %arg5: memref<16x96xf32, #tpu.memory_space<vmem>>, %arg6: memref<16x96xf32, #tpu.memory_space<vmem>>) attributes {dimension_semantics = [#tpu.dimension_semantics<parallel>, #tpu.dimension_semantics<parallel>, #tpu.dimension_semantics<arbitrary>], iteration_bounds = array<i64: 1, 1, 1>, scalar_prefetch = 0 : i64, scratch_operands = 1 : i64, tpu.core_type = #tpu.core_type<tc>, window_params = [{transform_indices = @transform_0, window_bounds = array<i64: 16, 32>}, {transform_indices = @transform_1, window_bounds = array<i64: 32, 96>}, {transform_indices = @transform_2, window_bounds = array<i64: 16, 96>}]} {
    %c0_i32 = arith.constant 0 : i32
    %0 = arith.cmpi eq, %arg2, %c0_i32 : i32
    %1 = arith.extui %0 : i1 to i32
    %c0_i32_0 = arith.constant 0 : i32
    %2 = arith.cmpi ne, %1, %c0_i32_0 : i32
    scf.if %2 {
      %cst_10 = arith.constant 0.000000e+00 : f32
      %12 = vector.broadcast %cst_10 : f32 to vector<16x96xf32>
      %c0_11 = arith.constant 0 : index
      %c0_12 = arith.constant 0 : index
      %13 = vector.load %arg6[%c0_11, %c0_12] : memref<16x96xf32, #tpu.memory_space<vmem>>, vector<16x96xf32>
      tpu.vector_store %arg6[%c0_11, %c0_12], %12 {strides = array<i32>} : memref<16x96xf32, #tpu.memory_space<vmem>>, vector<16x96xf32>,
    } else {
    }
    %c0 = arith.constant 0 : index
    %c0_1 = arith.constant 0 : index
    %3 = vector.load %arg6[%c0, %c0_1] : memref<16x96xf32, #tpu.memory_space<vmem>>, vector<16x96xf32>
    %c0_2 = arith.constant 0 : index
    %c0_3 = arith.constant 0 : index
    %4 = vector.load %arg3[%c0_2, %c0_3] : memref<16x32xf32, #tpu.memory_space<vmem>>, vector<16x32xf32>
    %c0_4 = arith.constant 0 : index
    %c0_5 = arith.constant 0 : index
    %5 = vector.load %arg4[%c0_4, %c0_5] : memref<32x96xf32, #tpu.memory_space<vmem>>, vector<32x96xf32>
    %cst = arith.constant dense<0.000000e+00> : vector<16x96xf32>
    %6 = tpu.matmul %4, %5, %cst {dimension_numbers = #tpu.dot_dimension_numbers<[1], [0], [0], [1], [0, 0, 1, 1], [], []>} : vector<16x32xf32>, vector<32x96xf32>, vector<16x96xf32> -> vector<16x96xf32>
    %7 = arith.addf %3, %6 : vector<16x96xf32>
    %c0_6 = arith.constant 0 : index
    %c0_7 = arith.constant 0 : index
    %8 = vector.load %arg6[%c0_6, %c0_7] : memref<16x96xf32, #tpu.memory_space<vmem>>, vector<16x96xf32>
    tpu.vector_store %arg6[%c0_6, %c0_7], %7 {strides = array<i32>} : memref<16x96xf32, #tpu.memory_space<vmem>>, vector<16x96xf32>,
    %c0_i32_8 = arith.constant 0 : i32
    %9 = arith.cmpi eq, %arg2, %c0_i32_8 : i32
    %10 = arith.extui %9 : i1 to i32
    %c0_i32_9 = arith.constant 0 : i32
    %11 = arith.cmpi ne, %10, %c0_i32_9 : i32
    scf.if %11 {
      %c0_10 = arith.constant 0 : index
      %c0_11 = arith.constant 0 : index
      %12 = vector.load %arg6[%c0_10, %c0_11] : memref<16x96xf32, #tpu.memory_space<vmem>>, vector<16x96xf32>
      %c0_12 = arith.constant 0 : index
      %c0_13 = arith.constant 0 : index
      %13 = vector.load %arg5[%c0_12, %c0_13] : memref<16x96xf32, #tpu.memory_space<vmem>>, vector<16x96xf32>
      tpu.vector_store %arg5[%c0_12, %c0_13], %12 {strides = array<i32>} : memref<16x96xf32, #tpu.memory_space<vmem>>, vector<16x96xf32>,
    } else {
    }
    return
  }
  func.func @transform_0(%arg0: i32, %arg1: i32, %arg2: i32) -> (i32, i32) {
    %c0_i32 = arith.constant 0 : i32
    return %arg0, %arg2 : i32, i32
  }
  func.func @transform_1(%arg0: i32, %arg1: i32, %arg2: i32) -> (i32, i32) {
    %c0_i32 = arith.constant 0 : i32
    return %arg2, %arg1 : i32, i32
  }
  func.func @transform_2(%arg0: i32, %arg1: i32, %arg2: i32) -> (i32, i32) {
    %c0_i32 = arith.constant 0 : i32
    return %arg0, %arg1 : i32, i32
  }
}

</mosaic_0001>

<llo_original>
// kernel: tpu_custom_call.1
$region0: #{tpu_custom_call.1}
  #allocation0 [shape = 'u32[]', space=smem, size = 0x4, offset = 0x4, fixed_abs, tag = 'smem constant byte address 0x4 - core index']
  #allocation1 [shape = 'u32[144,128]{1,0:T(1,128)}', space=vmem, size = 0x12000, scoped, tag = 'internal scratch']
  #allocation2 [shape = 'f32[16,96]{1,0:T(8,128)}', space=vmem, size = 0x2000, scoped, tag = 'scratch operand']
  %s0 = inlined_call_operand.hbm [shape: f32[16,32], index: 0, kind: input, shape index: {}]
  %s1 = inlined_call_operand.hbm [shape: f32[32,96], index: 1, kind: input, shape index: {}]
  %s2 = inlined_call_operand.hbm [shape: f32[16,96], index: 2, kind: output, shape index: {}]
  %s3 = sld [smem:[#allocation0]]
  $region34: #{tpu_custom_call.1} parent=0
    _
  %s5 = ssub.s32 1, %s3
  %s6 = scalar_select 0, %s5, %s3
  $region1: #{tpu_custom_call.1} parent=0
    #allocation3 [shape = 'u8[8192]{0}', space=vmem, size = 0x2000, scoped, tag = 'input window, operand 0, single buffered']
    #allocation4 [shape = 's32[1]{0}', space=sflag, size = 0x4, scoped, tag = 'scoped memory for tpu_custom_call.1']
    #allocation5 [shape = 's32[1]{0}', space=sflag, size = 0x4, scoped, tag = 'scoped memory for tpu_custom_call.1']
    #allocation6 [shape = 'u8[16384]{0}', space=vmem, size = 0x4000, scoped, tag = 'input window, operand 1, single buffered']
    #allocation7 [shape = 's32[1]{0}', space=sflag, size = 0x4, scoped, tag = 'scoped memory for tpu_custom_call.1']
    #allocation8 [shape = 'u8[8192]{0}', space=vmem, size = 0x2000, scoped, tag = 'output window, operand 0, single buffered']
    %7 = vsyncpa [#allocation4], 0
    %8 = vsyncpa [#allocation7], 0
    %9 = vsyncpa [#allocation5], 0
    // Predicated region
    $region2: #{tpu_custom_call.1} parent=1 // pred_check
      _
    $region3: #{tpu_custom_call.1} parent=1 // pred_check_branch
      %11 = sbr.rel (0) target = $region5
    $region4: #{tpu_custom_call.1} parent=1 // pred_region
      %s13 = ssub.s32 256, 256
      %14 = vsyncadd [#allocation4], %s13
      %s15 = sshll.u32 [#allocation3], 4
      %s16 = int_to_ptr.vmem [resolvable:$true] %s15
      %21 = dma.hbm_to_vmem [thread:$0]  %s0, 256, %s16, [#allocation4], 128, 128, 8
    $region5: #{tpu_custom_call.1} parent=1 // pred_fallthru
      _
    // Predicated region
    $region6: #{tpu_custom_call.1} parent=1 // pred_check
      _
    $region7: #{tpu_custom_call.1} parent=1 // pred_check_branch
      %23 = sbr.rel (0) target = $region9
    $region8: #{tpu_custom_call.1} parent=1 // pred_region
      %s25 = ssub.s32 512, 512
      %26 = vsyncadd [#allocation7], %s25
      %s27 = sshll.u32 [#allocation6], 4
      %s28 = int_to_ptr.vmem [resolvable:$true] %s27
      %33 = dma.hbm_to_vmem [thread:$0]  %s1, 512, %s28, [#allocation7], 128, 128, 8
    $region9: #{tpu_custom_call.1} parent=1 // pred_fallthru
      _
    // Predicated region
    $region10: #{tpu_custom_call.1} parent=1 // pred_check
      _
    $region11: #{tpu_custom_call.1} parent=1 // pred_check_branch
      %35 = sbr.rel (0) target = $region13
    $region12: #{tpu_custom_call.1} parent=1 // pred_region
      %36 = dma.done [#allocation4], 256
    $region13: #{tpu_custom_call.1} parent=1 // pred_fallthru
      _
    // Predicated region
    $region14: #{tpu_custom_call.1} parent=1 // pred_check
      _
    $region15: #{tpu_custom_call.1} parent=1 // pred_check_branch
      %38 = sbr.rel (0) target = $region17
    $region16: #{tpu_custom_call.1} parent=1 // pred_region
      %39 = dma.done [#allocation7], 512
    $region17: #{tpu_custom_call.1} parent=1 // pred_fallthru
      _
    %p40 = scmp.eq.s32.totalorder 0, 0
    // Predicated region
    $region18: #{tpu_custom_call.1} parent=1 // pred_check
      %p41 = pneg %p40
    $region19: #{tpu_custom_call.1} parent=1 // pred_check_branch
      %43 = sbr.rel (%p41) target = $region21
    $region20: #{tpu_custom_call.1} parent=1 // pred_region
      %vm44 = vcmask 785408
      %45 = vst.msk [vmem:[#allocation2] sm:$0xff] %vm44, 0.0
      %46 = vst.msk [vmem:[#allocation2 + $0x8] sm:$0xff] %vm44, 0.0
    $region21: #{tpu_custom_call.1} parent=1 // pred_fallthru
      _
    %v47 = vld [vmem:[#allocation2] sm:$0xff]
    %v48 = vld [vmem:[#allocation2 + $0x8] sm:$0xff]
    %v49 = vld [vmem:[#allocation3] sm:$0xff]
    %v50 = vld [vmem:[#allocation3 + $0x8] sm:$0xff]
    %v51 = vld [vmem:[#allocation6] sm:$0xff]
    %v52 = vld [vmem:[#allocation6 + $0x8] sm:$0xff]
    %v53 = vld [vmem:[#allocation6 + $0x10] sm:$0xff]
    %v54 = vld [vmem:[#allocation6 + $0x18] sm:$0xff]
    %vm55 = vcmask 261120
    %v57 = vsel %vm55, %v49, 0
    %v60 = vsel %vm55, %v50, 0
    %62 = vmatprep.subr.mxu0 0.0
    %63 = vmatpush1.msra.mxu0 %v51
    %64 = vmatprep.subr.mxu0 0.0
    %65 = vmatpush1.msra.mxu0 %v52
    %66 = vmatprep.subr.mxu0 0.0
    %67 = vmatpush1.msra.mxu0 %v53
    %68 = vmatprep.subr.mxu0 0.0
    %69 = vmatpush1.msra.mxu0 %v54
    %70 = vmatprep.subr.mxu0 0.0
    %71 = vmatpush1.msra.mxu0 0.0
    %72 = vmatprep.subr.mxu0 0.0
    %73 = vmatpush1.msra.mxu0 0.0
    %74 = vmatprep.subr.mxu0 0.0
    %75 = vmatpush1.msra.mxu0 0.0
    %76 = vmatprep.subr.mxu0 0.0
    %77 = vmatpush1.msra.mxu0 0.0
    %78 = vmatprep.subr.mxu0 0.0
    %79 = vmatpush1.msra.mxu0 0.0
    %80 = vmatprep.subr.mxu0 0.0
    %81 = vmatpush1.msra.mxu0 0.0
    %82 = vmatprep.subr.mxu0 0.0
    %83 = vmatpush1.msra.mxu0 0.0
    %84 = vmatprep.subr.mxu0 0.0
    %85 = vmatpush1.msra.mxu0 0.0
    %86 = vmatprep.subr.mxu0 0.0
    %87 = vmatpush1.msra.mxu0 0.0
    %88 = vmatprep.subr.mxu0 0.0
    %89 = vmatpush1.msra.mxu0 0.0
    %90 = vmatprep.subr.mxu0 0.0
    %91 = vmatpush1.msra.mxu0 0.0
    %92 = vmatprep.subr.mxu0 0.0
    %93 = vmatpush1.msra.mxu0 0.0
    %94 = vmatprep.subr.mxu0 0.0
    %95 = vmatpush1.msra.mxu0 0.0
    %96 = vmatprep.subr.mxu0 0.0
    %97 = vmatpush1.msra.mxu0 0.0
    %98 = vmatprep.subr.mxu0 0.0
    %99 = vmatpush1.msra.mxu0 0.0
    %100 = vmatprep.subr.mxu0 0.0
    %101 = vmatpush1.msra.mxu0 0.0
    %102 = vmatprep.subr.mxu0 0.0
    %103 = vmatpush1.msra.mxu0 0.0
    %104 = vmatprep.subr.mxu0 0.0
    %105 = vmatpush1.msra.mxu0 0.0
    %106 = vmatprep.subr.mxu0 0.0
    %107 = vmatpush1.msra.mxu0 0.0
    %108 = vmatprep.subr.mxu0 0.0
    %109 = vmatpush1.msra.mxu0 0.0
    %110 = vmatprep.subr.mxu0 0.0
    %111 = vmatpush1.msra.mxu0 0.0
    %112 = vmatprep.subr.mxu0 0.0
    %113 = vmatpush1.msra.mxu0 0.0
    %114 = vmatprep.subr.mxu0 0.0
    %115 = vmatpush1.msra.mxu0 0.0
    %116 = vmatprep.subr.mxu0 0.0
    %117 = vmatpush1.msra.mxu0 0.0
    %118 = vmatprep.subr.mxu0 0.0
    %119 = vmatpush1.msra.mxu0 0.0
    %120 = vmatprep.subr.mxu0 0.0
    %121 = vmatpush1.msra.mxu0 0.0
    %122 = vmatprep.subr.mxu0 0.0
    %123 = vmatpush1.msra.mxu0 0.0
    %124 = vmatprep.subr.mxu0 0.0
    %125 = vmatpush1.msra.mxu0 0.0
    %126 = vmatprep.mubr.f32.mxu0 0.0
    %127 = vmatmul.mubr.f32.gmra.mrb[0].mxu0 %v57
    %v128 = vpop.f32.mrb[0].mxu0
    %v129 = vadd.f32 0.0, %v128
    %v130 = vpop.f32.mrb[0].mxu0
    %131 = vmatprep.mubr.f32.mxu0 0.0
    %132 = vmatmul.mubr.f32.gmra.mrb[0].mxu0 %v60
    %v133 = vpop.f32.mrb[0].mxu0
    %v134 = vadd.f32 0.0, %v133
    %v135 = vpop.f32.mrb[0].mxu0
    %136 = vdwg.mxu0
    %v137 = vadd.f32 %v47, %v129
    %v138 = vadd.f32 %v48, %v134
    %vm139 = vcmask 785408
    %140 = vst.msk [vmem:[#allocation2] sm:$0xff] %vm139, %v137
    %141 = vst.msk [vmem:[#allocation2 + $0x8] sm:$0xff] %vm139, %v138
    // Predicated region
    $region22: #{tpu_custom_call.1} parent=1 // pred_check
      %p142 = pneg %p40
    $region23: #{tpu_custom_call.1} parent=1 // pred_check_branch
      %144 = sbr.rel (%p142) target = $region25
    $region24: #{tpu_custom_call.1} parent=1 // pred_region
      %v145 = vld [vmem:[#allocation2] sm:$0xff]
      %v146 = vld [vmem:[#allocation2 + $0x8] sm:$0xff]
      %147 = vst.msk [vmem:[#allocation8] sm:$0xff] %vm139, %v145
      %148 = vst.msk [vmem:[#allocation8 + $0x8] sm:$0xff] %vm139, %v146
    $region25: #{tpu_custom_call.1} parent=1 // pred_fallthru
      _
    // Predicated region
    $region26: #{tpu_custom_call.1} parent=1 // pred_check
      _
    $region27: #{tpu_custom_call.1} parent=1 // pred_check_branch
      %150 = sbr.rel (0) target = $region29
    $region28: #{tpu_custom_call.1} parent=1 // pred_region
      %s152 = ssub.s32 256, 256
      %153 = vsyncadd [#allocation5], %s152
      %s154 = sshll.u32 [#allocation8], 4
      %s155 = int_to_ptr.vmem [resolvable:$true] %s154
      %160 = dma.vmem_to_hbm [thread:$0]  %s155, 256, %s2, [#allocation5], 128, 128, 8
    $region29: #{tpu_custom_call.1} parent=1 // pred_fallthru
      _
    // Predicated region
    $region30: #{tpu_custom_call.1} parent=1 // pred_check
      _
    $region31: #{tpu_custom_call.1} parent=1 // pred_check_branch
      %162 = sbr.rel (0) target = $region33
    $region32: #{tpu_custom_call.1} parent=1 // pred_region
      %163 = dma.done [#allocation5], 256
    $region33: #{tpu_custom_call.1} parent=1 // pred_fallthru
      _
    %164 = vsyncpa [#allocation4], 1
    %165 = vsyncpa [#allocation7], 1
    %166 = vsyncpa [#allocation5], 1

</llo_original>
